<compile_context>
chip_gen: v7x
topology: tpu7x:2x2x1
jax: 0.10.0
libtpu: 0.0.40
codegen_flags: <defaults>
</compile_context>

<pallas_src>
import functools

import jax
import jax.numpy as jnp
from jax import lax
from jax.experimental import pallas as pl
from jax.experimental.pallas import tpu as pltpu

_EPS = 1e-5


def _cdiv(a, b):
    return (a + b - 1) // b


def _round_up(a, m):
    return _cdiv(a, m) * m


def _vmem_capacity_bytes():
    try:
        info = pltpu.get_tpu_info()
        cap = getattr(info, "vmem_capacity_bytes", None)
        if cap:
            return int(cap)
    except Exception:
        pass
    # Conservative fallback (v7x: 64 MiB per TC; v5e/v6e have 128 MiB).
    return 64 * 1024 * 1024


def _choose_row_tile(width, dtype_bytes, rows_needed):
    """Row tile targeting ~2 MiB/tile (pipelining sweet spot), VMEM-safe."""
    vmem_cap = _vmem_capacity_bytes()
    target = min(2 << 20, vmem_cap // 16)        # 2x in + 2x out buffers << VMEM
    tm = target // (width * dtype_bytes)
    tm = max(16, min(8192, (tm // 16) * 16))     # multiple of 16 (bf16 sublane pack)
    tm = min(tm, _round_up(rows_needed, 16))     # don't tile far past the data
    return tm, vmem_cap


# ------------------------------- kernels ------------------------------------

def _ln_reduce_kernel(x_ref, w_ref, o_ref, *, eps):
    # x_ref: (tm, H); w_ref: (1, H). One logical row per tile row.
    x = x_ref[...].astype(jnp.float32)
    mean = jnp.mean(x, axis=-1, keepdims=True)
    xc = x - mean                                   # centered once, reused
    var = jnp.mean(xc * xc, axis=-1, keepdims=True)
    y = xc * lax.rsqrt(var + eps)
    y = y * w_ref[...].astype(jnp.float32)
    o_ref[...] = y.astype(o_ref.dtype)


def _ln_reduce_bias_kernel(x_ref, w_ref, b_ref, o_ref, *, eps):
    x = x_ref[...].astype(jnp.float32)
    mean = jnp.mean(x, axis=-1, keepdims=True)
    xc = x - mean
    var = jnp.mean(xc * xc, axis=-1, keepdims=True)
    y = xc * lax.rsqrt(var + eps)
    y = y * w_ref[...].astype(jnp.float32) + b_ref[...].astype(jnp.float32)
    o_ref[...] = y.astype(o_ref.dtype)


def _ln_packed_kernel(x_ref, a_ref, w_ref, o_ref, *, eps):
    # x_ref: (tm, k*H) -- k independent rows packed along the lane dimension.
    # a_ref: (k*H, k*H) block-diagonal averaging matrix (1/H within a segment),
    # so x @ a broadcasts each segment's mean back across that segment's lanes.
    x = x_ref[...].astype(jnp.float32)
    a = a_ref[...]
    mean_b = jnp.dot(x, a, preferred_element_type=jnp.float32,
                     precision=lax.Precision.HIGHEST)
    xc = x - mean_b
    var_b = jnp.dot(xc * xc, a, preferred_element_type=jnp.float32,
                    precision=lax.Precision.HIGHEST)
    y = xc * lax.rsqrt(var_b + eps)
    y = y * w_ref[...].astype(jnp.float32)
    o_ref[...] = y.astype(o_ref.dtype)


def _ln_packed_bias_kernel(x_ref, a_ref, w_ref, b_ref, o_ref, *, eps):
    x = x_ref[...].astype(jnp.float32)
    a = a_ref[...]
    mean_b = jnp.dot(x, a, preferred_element_type=jnp.float32,
                     precision=lax.Precision.HIGHEST)
    xc = x - mean_b
    var_b = jnp.dot(xc * xc, a, preferred_element_type=jnp.float32,
                    precision=lax.Precision.HIGHEST)
    y = xc * lax.rsqrt(var_b + eps)
    y = y * w_ref[...].astype(jnp.float32) + b_ref[...].astype(jnp.float32)
    o_ref[...] = y.astype(o_ref.dtype)


# ------------------------------- wrapper -------------------------------------

def layer_norm(x, weight, bias=None, *, eps=_EPS):
    """LayerNorm over the last dim of x, matching F.layer_norm(..., eps=1e-5)."""
    orig_shape = x.shape
    H = orig_shape[-1]
    assert weight.shape == (H,)
    x2 = x.reshape(-1, H)
    R = x2.shape[0]
    dtype_bytes = jnp.dtype(x.dtype).itemsize

    # Lane packing: for small H put k independent rows side-by-side in the
    # 128-lane dim so the block's last dim is a multiple of 128 (lane-dense I/O).
    if H < 128 and (128 % H) == 0:
        k = 128 // H
    else:
        k = 1
    W = k * H

    rp_needed = _cdiv(R, k)                   # packed rows actually required
    tm, vmem_cap = _choose_row_tile(W, dtype_bytes, rp_needed)
    rp = _round_up(rp_needed, tm)             # padded packed row count
    grid = rp // tm
    r_pad = rp * k                            # padded logical row count

    if r_pad != R:
        x2 = jnp.pad(x2, ((0, r_pad - R), (0, 0)))
    xp = x2.reshape(rp, W)

    w_in = (jnp.tile(weight, k) if k > 1 else weight).reshape(1, W)
    has_bias = bias is not None
    if has_bias:
        b_in = (jnp.tile(bias, k) if k > 1 else bias).reshape(1, W)

    # VMEM accounting: double-buffered input + output tiles (+ params / A).
    tile_bytes = tm * W * dtype_bytes
    needed = 4 * tile_bytes + 8 * W * dtype_bytes + (W * W * 4 if k > 1 else 0)
    vmem_limit = max(2 * needed, 32 << 20)
    vmem_limit = min(vmem_limit, max(vmem_cap - (16 << 20), 32 << 20))

    cparams = pltpu.CompilerParams(
        dimension_semantics=("parallel",),    # row axis shards across TCs on v7x
        vmem_limit_bytes=int(vmem_limit),
    )

    x_spec = pl.BlockSpec((tm, W), lambda i: (i, 0))
    p_spec = pl.BlockSpec((1, W), lambda i: (0, 0))
    out_spec = pl.BlockSpec((tm, W), lambda i: (i, 0))
    out_shape = jax.ShapeDtypeStruct((rp, W), x.dtype)

    if k > 1:
        seg = jnp.arange(W, dtype=jnp.int32) // H
        a_mat = (seg[:, None] == seg[None, :]).astype(jnp.float32) / float(H)
        a_spec = pl.BlockSpec((W, W), lambda i: (0, 0))
        if has_bias:
            kern = functools.partial(_ln_packed_bias_kernel, eps=eps)
            in_specs = [x_spec, a_spec, p_spec, p_spec]
            args = (xp, a_mat, w_in, b_in)
        else:
            kern = functools.partial(_ln_packed_kernel, eps=eps)
            in_specs = [x_spec, a_spec, p_spec]
            args = (xp, a_mat, w_in)
    else:
        if has_bias:
            kern = functools.partial(_ln_reduce_bias_kernel, eps=eps)
            in_specs = [x_spec, p_spec, p_spec]
            args = (xp, w_in, b_in)
        else:
            kern = functools.partial(_ln_reduce_kernel, eps=eps)
            in_specs = [x_spec, p_spec]
            args = (xp, w_in)

    out = pl.pallas_call(
        kern,
        out_shape=out_shape,
        grid_spec=pltpu.PrefetchScalarGridSpec(
            num_scalar_prefetch=0,
            grid=(grid,),
            in_specs=in_specs,
            out_specs=out_spec,
        ),
        compiler_params=cparams,
    )(*args)

    out = out.reshape(r_pad, H)[:R]
    return out.reshape(orig_shape)


if __name__ == "__main__":
    key = jax.random.PRNGKey(0)
    batch, seq, hidden = 2, 8, 32

    x = jax.random.normal(key, (batch, seq, hidden), dtype=jnp.float32)

    # Mirror the module __init__: weight = ones(hidden_dim), bias=False -> None.
    weight = jnp.ones((hidden,), dtype=jnp.float32)
    bias = None

    y = layer_norm(x, weight, bias)
    y = jax.block_until_ready(y)

    # Pure-JAX reference (== F.layer_norm over the last dim, eps=1e-5).
    mean = jnp.mean(x, axis=-1, keepdims=True)
    var = jnp.mean((x - mean) ** 2, axis=-1, keepdims=True)
    ref = (x - mean) * lax.rsqrt(var + _EPS) * weight

    assert y.shape == x.shape
    assert jnp.allclose(y, ref, atol=1e-4, rtol=1e-4), "mismatch vs reference"
    print("KERNEL_OK")
</pallas_src>

<mosaic_0001>
module attributes {stable_mosaic.version = 11 : i64} {
  func.func @_ln_packed_kernel(%arg0: i32, %arg1: memref<16x128xf32, #tpu.memory_space<vmem>>, %arg2: memref<128x128xf32, #tpu.memory_space<vmem>>, %arg3: memref<1x128xf32, #tpu.memory_space<vmem>>, %arg4: memref<16x128xf32, #tpu.memory_space<vmem>>) attributes {dimension_semantics = [#tpu.dimension_semantics<parallel>], iteration_bounds = array<i64: 1>, scalar_prefetch = 0 : i64, scratch_operands = 0 : i64, tpu.core_type = #tpu.core_type<tc>, window_params = [{transform_indices = @transform_0, window_bounds = array<i64: 16, 128>}, {pipeline_mode = #tpu.pipeline_mode<synchronous>, transform_indices = @transform_1, window_bounds = array<i64: 128, 128>}, {pipeline_mode = #tpu.pipeline_mode<synchronous>, transform_indices = @transform_2, window_bounds = array<i64: 1, 128>}, {transform_indices = @transform_3, window_bounds = array<i64: 16, 128>}]} {
    %c0 = arith.constant 0 : index
    %c0_0 = arith.constant 0 : index
    %0 = vector.load %arg1[%c0, %c0_0] : memref<16x128xf32, #tpu.memory_space<vmem>>, vector<16x128xf32>
    %c0_1 = arith.constant 0 : index
    %c0_2 = arith.constant 0 : index
    %1 = vector.load %arg2[%c0_1, %c0_2] : memref<128x128xf32, #tpu.memory_space<vmem>>, vector<128x128xf32>
    %cst = arith.constant dense<0.000000e+00> : vector<16x128xf32>
    %2 = tpu.matmul %0, %1, %cst {dimension_numbers = #tpu.dot_dimension_numbers<[1], [0], [0], [1], [0, 0, 1, 1], [], []>, precision = #tpu.contract_precision<fp32>} : vector<16x128xf32>, vector<128x128xf32>, vector<16x128xf32> -> vector<16x128xf32>
    %3 = arith.subf %0, %2 : vector<16x128xf32>
    %4 = arith.mulf %3, %3 : vector<16x128xf32>
    %cst_3 = arith.constant dense<0.000000e+00> : vector<16x128xf32>
    %5 = tpu.matmul %4, %1, %cst_3 {dimension_numbers = #tpu.dot_dimension_numbers<[1], [0], [0], [1], [0, 0, 1, 1], [], []>, precision = #tpu.contract_precision<fp32>} : vector<16x128xf32>, vector<128x128xf32>, vector<16x128xf32> -> vector<16x128xf32>
    %cst_4 = arith.constant 9.99999974E-6 : f32
    %6 = vector.broadcast %cst_4 : f32 to vector<16x128xf32>
    %7 = arith.addf %5, %6 : vector<16x128xf32>
    %8 = math.rsqrt %7 : vector<16x128xf32>
    %9 = arith.mulf %3, %8 : vector<16x128xf32>
    %c0_5 = arith.constant 0 : index
    %c0_6 = arith.constant 0 : index
    %10 = vector.load %arg3[%c0_5, %c0_6] : memref<1x128xf32, #tpu.memory_space<vmem>>, vector<1x128xf32>
    %11 = vector.broadcast %10 : vector<1x128xf32> to vector<16x128xf32>
    %12 = arith.mulf %9, %11 : vector<16x128xf32>
    %c0_7 = arith.constant 0 : index
    %c0_8 = arith.constant 0 : index
    %13 = vector.load %arg4[%c0_7, %c0_8] : memref<16x128xf32, #tpu.memory_space<vmem>>, vector<16x128xf32>
    tpu.vector_store %arg4[%c0_7, %c0_8], %12 {strides = array<i32>} : memref<16x128xf32, #tpu.memory_space<vmem>>, vector<16x128xf32>,
    return
  }
  func.func @transform_0(%arg0: i32) -> (i32, i32) {
    %c0_i32 = arith.constant 0 : i32
    %c0_i32_0 = arith.constant 0 : i32
    return %arg0, %c0_i32 : i32, i32
  }
  func.func @transform_1(%arg0: i32) -> (i32, i32) {
    %c0_i32 = arith.constant 0 : i32
    %c0_i32_0 = arith.constant 0 : i32
    %c0_i32_1 = arith.constant 0 : i32
    return %c0_i32, %c0_i32_0 : i32, i32
  }
  func.func @transform_2(%arg0: i32) -> (i32, i32) {
    %c0_i32 = arith.constant 0 : i32
    %c0_i32_0 = arith.constant 0 : i32
    %c0_i32_1 = arith.constant 0 : i32
    return %c0_i32, %c0_i32_0 : i32, i32
  }
  func.func @transform_3(%arg0: i32) -> (i32, i32) {
    %c0_i32 = arith.constant 0 : i32
    %c0_i32_0 = arith.constant 0 : i32
    return %arg0, %c0_i32 : i32, i32
  }
}

</mosaic_0001>

<llo_original>
// kernel: tpu_custom_call.1
$region0: #{tpu_custom_call.1}
  #allocation0 [shape = 'u32[]', space=smem, size = 0x4, offset = 0x4, fixed_abs, tag = 'smem constant byte address 0x4 - core index']
  #allocation1 [shape = 'u32[144,128]{1,0:T(1,128)}', space=vmem, size = 0x12000, scoped, tag = 'internal scratch']
  %s0 = inlined_call_operand.hbm [shape: f32[16,128], index: 0, kind: input, shape index: {}]
  %s1 = inlined_call_operand.hbm [shape: f32[128,128], index: 1, kind: input, shape index: {}]
  %s2 = inlined_call_operand.vmem [shape: f32[1,128], index: 2, kind: input, shape index: {}]
  %s3 = inlined_call_operand.hbm [shape: f32[16,128], index: 3, kind: output, shape index: {}]
  %s4 = sld [smem:[#allocation0]]
  $region30: #{tpu_custom_call.1} parent=0
    _
  %s6 = ssub.s32 1, %s4
  %s7 = scalar_select 0, %s6, %s4
  $region1: #{tpu_custom_call.1} parent=0
    #allocation2 [shape = 'u8[8192]{0}', space=vmem, size = 0x2000, scoped, tag = 'input window, operand 0, single buffered']
    #allocation3 [shape = 's32[1]{0}', space=sflag, size = 0x4, scoped, tag = 'scoped memory for tpu_custom_call.1']
    #allocation4 [shape = 's32[1]{0}', space=sflag, size = 0x4, scoped, tag = 'scoped memory for tpu_custom_call.1']
    #allocation5 [shape = 'u8[65536]{0}', space=vmem, size = 0x10000, scoped, tag = 'input window, operand 1, single buffered']
    #allocation6 [shape = 's32[1]{0}', space=sflag, size = 0x4, scoped, tag = 'scoped memory for tpu_custom_call.1']
    #allocation7 [shape = 'u8[8192]{0}', space=vmem, size = 0x2000, scoped, tag = 'output window, operand 0, single buffered']
    %8 = vsyncpa [#allocation3], 0
    %9 = vsyncpa [#allocation6], 0
    %10 = vsyncpa [#allocation4], 0
    // Predicated region
    $region2: #{tpu_custom_call.1} parent=1 // pred_check
      _
    $region3: #{tpu_custom_call.1} parent=1 // pred_check_branch
      %12 = sbr.rel (0) target = $region5
    $region4: #{tpu_custom_call.1} parent=1 // pred_region
      %s14 = ssub.s32 256, 256
      %15 = vsyncadd [#allocation3], %s14
      %s16 = sshll.u32 [#allocation2], 4
      %s17 = int_to_ptr.vmem [resolvable:$true] %s16
      %22 = dma.hbm_to_vmem [thread:$0]  %s0, 256, %s17, [#allocation3], 128, 128, 8
    $region5: #{tpu_custom_call.1} parent=1 // pred_fallthru
      _
    // Predicated region
    $region6: #{tpu_custom_call.1} parent=1 // pred_check
      _
    $region7: #{tpu_custom_call.1} parent=1 // pred_check_branch
      %24 = sbr.rel (0) target = $region9
    $region8: #{tpu_custom_call.1} parent=1 // pred_region
      %s26 = ssub.s32 2048, 2048
      %27 = vsyncadd [#allocation6], %s26
      %s28 = sshll.u32 [#allocation5], 4
      %s29 = int_to_ptr.vmem [resolvable:$true] %s28
      %34 = dma.hbm_to_vmem [thread:$0]  %s1, 2048, %s29, [#allocation6], 128, 128, 8
    $region9: #{tpu_custom_call.1} parent=1 // pred_fallthru
      _
    // Predicated region
    $region10: #{tpu_custom_call.1} parent=1 // pred_check
      _
    $region11: #{tpu_custom_call.1} parent=1 // pred_check_branch
      %36 = sbr.rel (0) target = $region13
    $region12: #{tpu_custom_call.1} parent=1 // pred_region
      _
    $region13: #{tpu_custom_call.1} parent=1 // pred_fallthru
      _
    // Predicated region
    $region14: #{tpu_custom_call.1} parent=1 // pred_check
      _
    $region15: #{tpu_custom_call.1} parent=1 // pred_check_branch
      %38 = sbr.rel (0) target = $region17
    $region16: #{tpu_custom_call.1} parent=1 // pred_region
      %39 = dma.done [#allocation3], 256
    $region17: #{tpu_custom_call.1} parent=1 // pred_fallthru
      _
    // Predicated region
    $region18: #{tpu_custom_call.1} parent=1 // pred_check
      _
    $region19: #{tpu_custom_call.1} parent=1 // pred_check_branch
      %41 = sbr.rel (0) target = $region21
    $region20: #{tpu_custom_call.1} parent=1 // pred_region
      %42 = dma.done [#allocation6], 2048
    $region21: #{tpu_custom_call.1} parent=1 // pred_fallthru
      _
    %v43 = vld [vmem:[#allocation2] sm:$0xff]
    %v44 = vld [vmem:[#allocation2 + $0x8] sm:$0xff]
    %v45 = vld [vmem:[#allocation5] sm:$0xff]
    %v46 = vld [vmem:[#allocation5 + $0x8] sm:$0xff]
    %v47 = vld [vmem:[#allocation5 + $0x10] sm:$0xff]
    %v48 = vld [vmem:[#allocation5 + $0x18] sm:$0xff]
    %v49 = vld [vmem:[#allocation5 + $0x20] sm:$0xff]
    %v50 = vld [vmem:[#allocation5 + $0x28] sm:$0xff]
    %v51 = vld [vmem:[#allocation5 + $0x30] sm:$0xff]
    %v52 = vld [vmem:[#allocation5 + $0x38] sm:$0xff]
    %v53 = vld [vmem:[#allocation5 + $0x40] sm:$0xff]
    %v54 = vld [vmem:[#allocation5 + $0x48] sm:$0xff]
    %v55 = vld [vmem:[#allocation5 + $0x50] sm:$0xff]
    %v56 = vld [vmem:[#allocation5 + $0x58] sm:$0xff]
    %v57 = vld [vmem:[#allocation5 + $0x60] sm:$0xff]
    %v58 = vld [vmem:[#allocation5 + $0x68] sm:$0xff]
    %v59 = vld [vmem:[#allocation5 + $0x70] sm:$0xff]
    %v60 = vld [vmem:[#allocation5 + $0x78] sm:$0xff]
    %61 = vmatprep.subr.mxu0 0.0
    %v62 = vand.u32 %v45, 4294901760
    %63 = vmatpush1.msra.mxu0 %v62
    %64 = vmatprep.subr.mxu0 0.0
    %v65 = vand.u32 %v46, 4294901760
    %66 = vmatpush1.msra.mxu0 %v65
    %67 = vmatprep.subr.mxu0 0.0
    %v68 = vand.u32 %v47, 4294901760
    %69 = vmatpush1.msra.mxu0 %v68
    %70 = vmatprep.subr.mxu0 0.0
    %v71 = vand.u32 %v48, 4294901760
    %72 = vmatpush1.msra.mxu0 %v71
    %73 = vmatprep.subr.mxu0 0.0
    %v74 = vand.u32 %v49, 4294901760
    %75 = vmatpush1.msra.mxu0 %v74
    %76 = vmatprep.subr.mxu0 0.0
    %v77 = vand.u32 %v50, 4294901760
    %78 = vmatpush1.msra.mxu0 %v77
    %79 = vmatprep.subr.mxu0 0.0
    %v80 = vand.u32 %v51, 4294901760
    %81 = vmatpush1.msra.mxu0 %v80
    %82 = vmatprep.subr.mxu0 0.0
    %v83 = vand.u32 %v52, 4294901760
    %84 = vmatpush1.msra.mxu0 %v83
    %85 = vmatprep.subr.mxu0 0.0
    %v86 = vand.u32 %v53, 4294901760
    %87 = vmatpush1.msra.mxu0 %v86
    %88 = vmatprep.subr.mxu0 0.0
    %v89 = vand.u32 %v54, 4294901760
    %90 = vmatpush1.msra.mxu0 %v89
    %91 = vmatprep.subr.mxu0 0.0
    %v92 = vand.u32 %v55, 4294901760
    %93 = vmatpush1.msra.mxu0 %v92
    %94 = vmatprep.subr.mxu0 0.0
    %v95 = vand.u32 %v56, 4294901760
    %96 = vmatpush1.msra.mxu0 %v95
    %97 = vmatprep.subr.mxu0 0.0
    %v98 = vand.u32 %v57, 4294901760
    %99 = vmatpush1.msra.mxu0 %v98
    %100 = vmatprep.subr.mxu0 0.0
    %v101 = vand.u32 %v58, 4294901760
    %102 = vmatpush1.msra.mxu0 %v101
    %103 = vmatprep.subr.mxu0 0.0
    %v104 = vand.u32 %v59, 4294901760
    %105 = vmatpush1.msra.mxu0 %v104
    %106 = vmatprep.subr.mxu0 0.0
    %v107 = vand.u32 %v60, 4294901760
    %108 = vmatpush1.msra.mxu0 %v107
    %109 = vmatprep.subr.mxu0 0.0
    %110 = vmatpush1.msra.mxu0 0.0
    %111 = vmatprep.subr.mxu0 0.0
    %112 = vmatpush1.msra.mxu0 0.0
    %113 = vmatprep.subr.mxu0 0.0
    %114 = vmatpush1.msra.mxu0 0.0
    %115 = vmatprep.subr.mxu0 0.0
    %116 = vmatpush1.msra.mxu0 0.0
    %117 = vmatprep.subr.mxu0 0.0
    %118 = vmatpush1.msra.mxu0 0.0
    %119 = vmatprep.subr.mxu0 0.0
    %120 = vmatpush1.msra.mxu0 0.0
    %121 = vmatprep.subr.mxu0 0.0
    %122 = vmatpush1.msra.mxu0 0.0
    %123 = vmatprep.subr.mxu0 0.0
    %124 = vmatpush1.msra.mxu0 0.0
    %125 = vmatprep.subr.mxu0 0.0
    %126 = vmatpush1.msra.mxu0 0.0
    %127 = vmatprep.subr.mxu0 0.0
    %128 = vmatpush1.msra.mxu0 0.0
    %129 = vmatprep.subr.mxu0 0.0
    %130 = vmatpush1.msra.mxu0 0.0
    %131 = vmatprep.subr.mxu0 0.0
    %132 = vmatpush1.msra.mxu0 0.0
    %133 = vmatprep.subr.mxu0 0.0
    %134 = vmatpush1.msra.mxu0 0.0
    %135 = vmatprep.subr.mxu0 0.0
    %136 = vmatpush1.msra.mxu0 0.0
    %137 = vmatprep.subr.mxu0 0.0
    %138 = vmatpush1.msra.mxu0 0.0
    %139 = vmatprep.subr.mxu0 0.0
    %140 = vmatpush1.msra.mxu0 0.0
    %141 = vmatprep.mubr.f32.mxu0 0.0
    %v142 = vand.u32 %v43, 4294901760
    %v143 = vsub.f32 %v43, %v142
    %v144 = vand.u32 %v143, 4294901760
    %v145 = vsub.f32 %v143, %v144
    %v146 = vand.u32 %v145, 4294901760
    %147 = vmatmul.mubr.f32.gmra.mrb[0].mxu0 %v146
    %v148 = vpop.f32.mrb[0].mxu0
    %v149 = vadd.f32 0.0, %v148
    %v150 = vpop.f32.mrb[0].mxu0
    %151 = vmatprep.mubr.f32.mxu0 0.0
    %v152 = vand.u32 %v44, 4294901760
    %v153 = vsub.f32 %v44, %v152
    %v154 = vand.u32 %v153, 4294901760
    %v155 = vsub.f32 %v153, %v154
    %v156 = vand.u32 %v155, 4294901760
    %157 = vmatmul.mubr.f32.gmra.mrb[0].mxu0 %v156
    %v158 = vpop.f32.mrb[0].mxu0
    %v159 = vadd.f32 0.0, %v158
    %v160 = vpop.f32.mrb[0].mxu0
    %161 = vdwg.mxu0
    %162 = vmatprep.subr.mxu0 0.0
    %v163 = vand.u32 %v45, 4294901760
    %v164 = vsub.f32 %v45, %v163
    %v165 = vand.u32 %v164, 4294901760
    %v166 = vsub.f32 %v164, %v165
    %v167 = vand.u32 %v166, 4294901760
    %168 = vmatpush1.msra.mxu0 %v167
    %169 = vmatprep.subr.mxu0 0.0
    %v170 = vand.u32 %v46, 4294901760
    %v171 = vsub.f32 %v46, %v170
    %v172 = vand.u32 %v171, 4294901760
    %v173 = vsub.f32 %v171, %v172
    %v174 = vand.u32 %v173, 4294901760
    %175 = vmatpush1.msra.mxu0 %v174
    %176 = vmatprep.subr.mxu0 0.0
    %v177 = vand.u32 %v47, 4294901760
    %v178 = vsub.f32 %v47, %v177
    %v179 = vand.u32 %v178, 4294901760
    %v180 = vsub.f32 %v178, %v179
    %v181 = vand.u32 %v180, 4294901760
    %182 = vmatpush1.msra.mxu0 %v181
    %183 = vmatprep.subr.mxu0 0.0
    %v184 = vand.u32 %v48, 4294901760
    %v185 = vsub.f32 %v48, %v184
    %v186 = vand.u32 %v185, 4294901760
    %v187 = vsub.f32 %v185, %v186
    %v188 = vand.u32 %v187, 4294901760
    %189 = vmatpush1.msra.mxu0 %v188
    %190 = vmatprep.subr.mxu0 0.0
    %v191 = vand.u32 %v49, 4294901760
    %v192 = vsub.f32 %v49, %v191
    %v193 = vand.u32 %v192, 4294901760
    %v194 = vsub.f32 %v192, %v193
    %v195 = vand.u32 %v194, 4294901760
    %196 = vmatpush1.msra.mxu0 %v195
    %197 = vmatprep.subr.mxu0 0.0
    %v198 = vand.u32 %v50, 4294901760
    %v199 = vsub.f32 %v50, %v198
    %v200 = vand.u32 %v199, 4294901760
    %v201 = vsub.f32 %v199, %v200
    %v202 = vand.u32 %v201, 4294901760
    %203 = vmatpush1.msra.mxu0 %v202
    %204 = vmatprep.subr.mxu0 0.0
    %v205 = vand.u32 %v51, 4294901760
    %v206 = vsub.f32 %v51, %v205
    %v207 = vand.u32 %v206, 4294901760
    %v208 = vsub.f32 %v206, %v207
    %v209 = vand.u32 %v208, 4294901760
    %210 = vmatpush1.msra.mxu0 %v209
    %211 = vmatprep.subr.mxu0 0.0
    %v212 = vand.u32 %v52, 4294901760
    %v213 = vsub.f32 %v52, %v212
    %v214 = vand.u32 %v213, 4294901760
    %v215 = vsub.f32 %v213, %v214
    %v216 = vand.u32 %v215, 4294901760
    %217 = vmatpush1.msra.mxu0 %v216
    %218 = vmatprep.subr.mxu0 0.0
    %v219 = vand.u32 %v53, 4294901760
    %v220 = vsub.f32 %v53, %v219
    %v221 = vand.u32 %v220, 4294901760
    %v222 = vsub.f32 %v220, %v221
    %v223 = vand.u32 %v222, 4294901760
    %224 = vmatpush1.msra.mxu0 %v223
    %225 = vmatprep.subr.mxu0 0.0
    %v226 = vand.u32 %v54, 4294901760
    %v227 = vsub.f32 %v54, %v226
    %v228 = vand.u32 %v227, 4294901760
    %v229 = vsub.f32 %v227, %v228
    %v230 = vand.u32 %v229, 4294901760
    %231 = vmatpush1.msra.mxu0 %v230
    %232 = vmatprep.subr.mxu0 0.0
    %v233 = vand.u32 %v55, 4294901760
    %v234 = vsub.f32 %v55, %v233
    %v235 = vand.u32 %v234, 4294901760
    %v236 = vsub.f32 %v234, %v235
    %v237 = vand.u32 %v236, 4294901760
    %238 = vmatpush1.msra.mxu0 %v237
    %239 = vmatprep.subr.mxu0 0.0
    %v240 = vand.u32 %v56, 4294901760
    %v241 = vsub.f32 %v56, %v240
    %v242 = vand.u32 %v241, 4294901760
    %v243 = vsub.f32 %v241, %v242
    %v244 = vand.u32 %v243, 4294901760
    %245 = vmatpush1.msra.mxu0 %v244
    %246 = vmatprep.subr.mxu0 0.0
    %v247 = vand.u32 %v57, 4294901760
    %v248 = vsub.f32 %v57, %v247
    %v249 = vand.u32 %v248, 4294901760
    %v250 = vsub.f32 %v248, %v249
    %v251 = vand.u32 %v250, 4294901760
    %252 = vmatpush1.msra.mxu0 %v251
    %253 = vmatprep.subr.mxu0 0.0
    %v254 = vand.u32 %v58, 4294901760
    %v255 = vsub.f32 %v58, %v254
    %v256 = vand.u32 %v255, 4294901760
    %v257 = vsub.f32 %v255, %v256
    %v258 = vand.u32 %v257, 4294901760
    %259 = vmatpush1.msra.mxu0 %v258
    %260 = vmatprep.subr.mxu0 0.0
    %v261 = vand.u32 %v59, 4294901760
    %v262 = vsub.f32 %v59, %v261
    %v263 = vand.u32 %v262, 4294901760
    %v264 = vsub.f32 %v262, %v263
    %v265 = vand.u32 %v264, 4294901760
    %266 = vmatpush1.msra.mxu0 %v265
    %267 = vmatprep.subr.mxu0 0.0
    %v268 = vand.u32 %v60, 4294901760
    %v269 = vsub.f32 %v60, %v268
    %v270 = vand.u32 %v269, 4294901760
    %v271 = vsub.f32 %v269, %v270
    %v272 = vand.u32 %v271, 4294901760
    %273 = vmatpush1.msra.mxu0 %v272
    %274 = vmatprep.subr.mxu0 0.0
    %275 = vmatpush1.msra.mxu0 0.0
    %276 = vmatprep.subr.mxu0 0.0
    %277 = vmatpush1.msra.mxu0 0.0
    %278 = vmatprep.subr.mxu0 0.0
    %279 = vmatpush1.msra.mxu0 0.0
    %280 = vmatprep.subr.mxu0 0.0
    %281 = vmatpush1.msra.mxu0 0.0
    %282 = vmatprep.subr.mxu0 0.0
    %283 = vmatpush1.msra.mxu0 0.0
    %284 = vmatprep.subr.mxu0 0.0
    %285 = vmatpush1.msra.mxu0 0.0
    %286 = vmatprep.subr.mxu0 0.0
    %287 = vmatpush1.msra.mxu0 0.0
    %288 = vmatprep.subr.mxu0 0.0
    %289 = vmatpush1.msra.mxu0 0.0
    %290 = vmatprep.subr.mxu0 0.0
    %291 = vmatpush1.msra.mxu0 0.0
    %292 = vmatprep.subr.mxu0 0.0
    %293 = vmatpush1.msra.mxu0 0.0
    %294 = vmatprep.subr.mxu0 0.0
    %295 = vmatpush1.msra.mxu0 0.0
    %296 = vmatprep.subr.mxu0 0.0
    %297 = vmatpush1.msra.mxu0 0.0
    %298 = vmatprep.subr.mxu0 0.0
    %299 = vmatpush1.msra.mxu0 0.0
    %300 = vmatprep.subr.mxu0 0.0
    %301 = vmatpush1.msra.mxu0 0.0
    %302 = vmatprep.subr.mxu0 0.0
    %303 = vmatpush1.msra.mxu0 0.0
    %304 = vmatprep.subr.mxu0 0.0
    %305 = vmatpush1.msra.mxu0 0.0
    %306 = vmatprep.mubr.f32.mxu0 0.0
    %v307 = vand.u32 %v43, 4294901760
    %308 = vmatmul.mubr.f32.gmra.mrb[0].mxu0 %v307
    %v309 = vpop.f32.mrb[0].mxu0
    %v310 = vadd.f32 %v149, %v309
    %v311 = vpop.f32.mrb[0].mxu0
    %312 = vmatprep.mubr.f32.mxu0 0.0
    %v313 = vand.u32 %v44, 4294901760
    %314 = vmatmul.mubr.f32.gmra.mrb[0].mxu0 %v313
    %v315 = vpop.f32.mrb[0].mxu0
    %v316 = vadd.f32 %v159, %v315
    %v317 = vpop.f32.mrb[0].mxu0
    %318 = vdwg.mxu0
    %319 = vmatprep.subr.mxu0 0.0
    %v320 = vand.u32 %v45, 4294901760
    %v321 = vsub.f32 %v45, %v320
    %322 = vmatpush1.msra.mxu0 %v321
    %323 = vmatprep.subr.mxu0 0.0
    %v324 = vand.u32 %v46, 4294901760
    %v325 = vsub.f32 %v46, %v324
    %326 = vmatpush1.msra.mxu0 %v325
    %327 = vmatprep.subr.mxu0 0.0
    %v328 = vand.u32 %v47, 4294901760
    %v329 = vsub.f32 %v47, %v328
    %330 = vmatpush1.msra.mxu0 %v329
    %331 = vmatprep.subr.mxu0 0.0
    %v332 = vand.u32 %v48, 4294901760
    %v333 = vsub.f32 %v48, %v332
    %334 = vmatpush1.msra.mxu0 %v333
    %335 = vmatprep.subr.mxu0 0.0
    %v336 = vand.u32 %v49, 4294901760
    %v337 = vsub.f32 %v49, %v336
    %338 = vmatpush1.msra.mxu0 %v337
    %339 = vmatprep.subr.mxu0 0.0
    %v340 = vand.u32 %v50, 4294901760
    %v341 = vsub.f32 %v50, %v340
    %342 = vmatpush1.msra.mxu0 %v341
    %343 = vmatprep.subr.mxu0 0.0
    %v344 = vand.u32 %v51, 4294901760
    %v345 = vsub.f32 %v51, %v344
    %346 = vmatpush1.msra.mxu0 %v345
    %347 = vmatprep.subr.mxu0 0.0
    %v348 = vand.u32 %v52, 4294901760
    %v349 = vsub.f32 %v52, %v348
    %350 = vmatpush1.msra.mxu0 %v349
    %351 = vmatprep.subr.mxu0 0.0
    %v352 = vand.u32 %v53, 4294901760
    %v353 = vsub.f32 %v53, %v352
    %354 = vmatpush1.msra.mxu0 %v353
    %355 = vmatprep.subr.mxu0 0.0
    %v356 = vand.u32 %v54, 4294901760
    %v357 = vsub.f32 %v54, %v356
    %358 = vmatpush1.msra.mxu0 %v357
    %359 = vmatprep.subr.mxu0 0.0
    %v360 = vand.u32 %v55, 4294901760
    %v361 = vsub.f32 %v55, %v360
    %362 = vmatpush1.msra.mxu0 %v361
    %363 = vmatprep.subr.mxu0 0.0
    %v364 = vand.u32 %v56, 4294901760
    %v365 = vsub.f32 %v56, %v364
    %366 = vmatpush1.msra.mxu0 %v365
    %367 = vmatprep.subr.mxu0 0.0
    %v368 = vand.u32 %v57, 4294901760
    %v369 = vsub.f32 %v57, %v368
    %370 = vmatpush1.msra.mxu0 %v369
    %371 = vmatprep.subr.mxu0 0.0
    %v372 = vand.u32 %v58, 4294901760
    %v373 = vsub.f32 %v58, %v372
    %374 = vmatpush1.msra.mxu0 %v373
    %375 = vmatprep.subr.mxu0 0.0
    %v376 = vand.u32 %v59, 4294901760
    %v377 = vsub.f32 %v59, %v376
    %378 = vmatpush1.msra.mxu0 %v377
    %379 = vmatprep.subr.mxu0 0.0
    %v380 = vand.u32 %v60, 4294901760
    %v381 = vsub.f32 %v60, %v380
    %382 = vmatpush1.msra.mxu0 %v381
    %383 = vmatprep.subr.mxu0 0.0
    %384 = vmatpush1.msra.mxu0 0.0
    %385 = vmatprep.subr.mxu0 0.0
    %386 = vmatpush1.msra.mxu0 0.0
    %387 = vmatprep.subr.mxu0 0.0
    %388 = vmatpush1.msra.mxu0 0.0
    %389 = vmatprep.subr.mxu0 0.0
    %390 = vmatpush1.msra.mxu0 0.0
    %391 = vmatprep.subr.mxu0 0.0
    %392 = vmatpush1.msra.mxu0 0.0
    %393 = vmatprep.subr.mxu0 0.0
    %394 = vmatpush1.msra.mxu0 0.0
    %395 = vmatprep.subr.mxu0 0.0
    %396 = vmatpush1.msra.mxu0 0.0
    %397 = vmatprep.subr.mxu0 0.0
    %398 = vmatpush1.msra.mxu0 0.0
    %399 = vmatprep.subr.mxu0 0.0
    %400 = vmatpush1.msra.mxu0 0.0
    %401 = vmatprep.subr.mxu0 0.0
    %402 = vmatpush1.msra.mxu0 0.0
    %403 = vmatprep.subr.mxu0 0.0
    %404 = vmatpush1.msra.mxu0 0.0
    %405 = vmatprep.subr.mxu0 0.0
    %406 = vmatpush1.msra.mxu0 0.0
    %407 = vmatprep.subr.mxu0 0.0
    %408 = vmatpush1.msra.mxu0 0.0
    %409 = vmatprep.subr.mxu0 0.0
    %410 = vmatpush1.msra.mxu0 0.0
    %411 = vmatprep.subr.mxu0 0.0
    %412 = vmatpush1.msra.mxu0 0.0
    %413 = vmatprep.subr.mxu0 0.0
    %414 = vmatpush1.msra.mxu0 0.0
    %415 = vmatprep.mubr.f32.mxu0 0.0
    %v416 = vand.u32 %v43, 4294901760
    %v417 = vsub.f32 %v43, %v416
    %418 = vmatmul.mubr.f32.gmra.mrb[0].mxu0 %v417
    %v419 = vpop.f32.mrb[0].mxu0
    %v420 = vadd.f32 %v310, %v419
    %v421 = vpop.f32.mrb[0].mxu0
    %422 = vmatprep.mubr.f32.mxu0 0.0
    %v423 = vand.u32 %v44, 4294901760
    %v424 = vsub.f32 %v44, %v423
    %425 = vmatmul.mubr.f32.gmra.mrb[0].mxu0 %v424
    %v426 = vpop.f32.mrb[0].mxu0
    %v427 = vadd.f32 %v316, %v426
    %v428 = vpop.f32.mrb[0].mxu0
    %429 = vdwg.mxu0
    %430 = vmatprep.subr.mxu0 0.0
    %v431 = vand.u32 %v45, 4294901760
    %432 = vmatpush1.msra.mxu0 %v431
    %433 = vmatprep.subr.mxu0 0.0
    %v434 = vand.u32 %v46, 4294901760
    %435 = vmatpush1.msra.mxu0 %v434
    %436 = vmatprep.subr.mxu0 0.0
    %v437 = vand.u32 %v47, 4294901760
    %438 = vmatpush1.msra.mxu0 %v437
    %439 = vmatprep.subr.mxu0 0.0
    %v440 = vand.u32 %v48, 4294901760
    %441 = vmatpush1.msra.mxu0 %v440
    %442 = vmatprep.subr.mxu0 0.0
    %v443 = vand.u32 %v49, 4294901760
    %444 = vmatpush1.msra.mxu0 %v443
    %445 = vmatprep.subr.mxu0 0.0
    %v446 = vand.u32 %v50, 4294901760
    %447 = vmatpush1.msra.mxu0 %v446
    %448 = vmatprep.subr.mxu0 0.0
    %v449 = vand.u32 %v51, 4294901760
    %450 = vmatpush1.msra.mxu0 %v449
    %451 = vmatprep.subr.mxu0 0.0
    %v452 = vand.u32 %v52, 4294901760
    %453 = vmatpush1.msra.mxu0 %v452
    %454 = vmatprep.subr.mxu0 0.0
    %v455 = vand.u32 %v53, 4294901760
    %456 = vmatpush1.msra.mxu0 %v455
    %457 = vmatprep.subr.mxu0 0.0
    %v458 = vand.u32 %v54, 4294901760
    %459 = vmatpush1.msra.mxu0 %v458
    %460 = vmatprep.subr.mxu0 0.0
    %v461 = vand.u32 %v55, 4294901760
    %462 = vmatpush1.msra.mxu0 %v461
    %463 = vmatprep.subr.mxu0 0.0
    %v464 = vand.u32 %v56, 4294901760
    %465 = vmatpush1.msra.mxu0 %v464
    %466 = vmatprep.subr.mxu0 0.0
    %v467 = vand.u32 %v57, 4294901760
    %468 = vmatpush1.msra.mxu0 %v467
    %469 = vmatprep.subr.mxu0 0.0
    %v470 = vand.u32 %v58, 4294901760
    %471 = vmatpush1.msra.mxu0 %v470
    %472 = vmatprep.subr.mxu0 0.0
    %v473 = vand.u32 %v59, 4294901760
    %474 = vmatpush1.msra.mxu0 %v473
    %475 = vmatprep.subr.mxu0 0.0
    %v476 = vand.u32 %v60, 4294901760
    %477 = vmatpush1.msra.mxu0 %v476
    %478 = vmatprep.subr.mxu0 0.0
    %479 = vmatpush1.msra.mxu0 0.0
    %480 = vmatprep.subr.mxu0 0.0
    %481 = vmatpush1.msra.mxu0 0.0
    %482 = vmatprep.subr.mxu0 0.0
    %483 = vmatpush1.msra.mxu0 0.0
    %484 = vmatprep.subr.mxu0 0.0
    %485 = vmatpush1.msra.mxu0 0.0
    %486 = vmatprep.subr.mxu0 0.0
    %487 = vmatpush1.msra.mxu0 0.0
    %488 = vmatprep.subr.mxu0 0.0
    %489 = vmatpush1.msra.mxu0 0.0
    %490 = vmatprep.subr.mxu0 0.0
    %491 = vmatpush1.msra.mxu0 0.0
    %492 = vmatprep.subr.mxu0 0.0
    %493 = vmatpush1.msra.mxu0 0.0
    %494 = vmatprep.subr.mxu0 0.0
    %495 = vmatpush1.msra.mxu0 0.0
    %496 = vmatprep.subr.mxu0 0.0
    %497 = vmatpush1.msra.mxu0 0.0
    %498 = vmatprep.subr.mxu0 0.0
    %499 = vmatpush1.msra.mxu0 0.0
    %500 = vmatprep.subr.mxu0 0.0
    %501 = vmatpush1.msra.mxu0 0.0
    %502 = vmatprep.subr.mxu0 0.0
    %503 = vmatpush1.msra.mxu0 0.0
    %504 = vmatprep.subr.mxu0 0.0
    %505 = vmatpush1.msra.mxu0 0.0
    %506 = vmatprep.subr.mxu0 0.0
    %507 = vmatpush1.msra.mxu0 0.0
    %508 = vmatprep.subr.mxu0 0.0
    %509 = vmatpush1.msra.mxu0 0.0
    %510 = vmatprep.mubr.f32.mxu0 0.0
    %v511 = vand.u32 %v43, 4294901760
    %v512 = vsub.f32 %v43, %v511
    %v513 = vand.u32 %v512, 4294901760
    %514 = vmatmul.mubr.f32.gmra.mrb[0].mxu0 %v513
    %v515 = vpop.f32.mrb[0].mxu0
    %v516 = vadd.f32 %v420, %v515
    %v517 = vpop.f32.mrb[0].mxu0
    %518 = vmatprep.mubr.f32.mxu0 0.0
    %v519 = vand.u32 %v44, 4294901760
    %v520 = vsub.f32 %v44, %v519
    %v521 = vand.u32 %v520, 4294901760
    %522 = vmatmul.mubr.f32.gmra.mrb[0].mxu0 %v521
    %v523 = vpop.f32.mrb[0].mxu0
    %v524 = vadd.f32 %v427, %v523
    %v525 = vpop.f32.mrb[0].mxu0
    %526 = vdwg.mxu0
    %527 = vmatprep.subr.mxu0 0.0
    %v528 = vand.u32 %v45, 4294901760
    %v529 = vsub.f32 %v45, %v528
    %v530 = vand.u32 %v529, 4294901760
    %531 = vmatpush1.msra.mxu0 %v530
    %532 = vmatprep.subr.mxu0 0.0
    %v533 = vand.u32 %v46, 4294901760
    %v534 = vsub.f32 %v46, %v533
    %v535 = vand.u32 %v534, 4294901760
    %536 = vmatpush1.msra.mxu0 %v535
    %537 = vmatprep.subr.mxu0 0.0
    %v538 = vand.u32 %v47, 4294901760
    %v539 = vsub.f32 %v47, %v538
    %v540 = vand.u32 %v539, 4294901760
    %541 = vmatpush1.msra.mxu0 %v540
    %542 = vmatprep.subr.mxu0 0.0
    %v543 = vand.u32 %v48, 4294901760
    %v544 = vsub.f32 %v48, %v543
    %v545 = vand.u32 %v544, 4294901760
    %546 = vmatpush1.msra.mxu0 %v545
    %547 = vmatprep.subr.mxu0 0.0
    %v548 = vand.u32 %v49, 4294901760
    %v549 = vsub.f32 %v49, %v548
    %v550 = vand.u32 %v549, 4294901760
    %551 = vmatpush1.msra.mxu0 %v550
    %552 = vmatprep.subr.mxu0 0.0
    %v553 = vand.u32 %v50, 4294901760
    %v554 = vsub.f32 %v50, %v553
    %v555 = vand.u32 %v554, 4294901760
    %556 = vmatpush1.msra.mxu0 %v555
    %557 = vmatprep.subr.mxu0 0.0
    %v558 = vand.u32 %v51, 4294901760
    %v559 = vsub.f32 %v51, %v558
    %v560 = vand.u32 %v559, 4294901760
    %561 = vmatpush1.msra.mxu0 %v560
    %562 = vmatprep.subr.mxu0 0.0
    %v563 = vand.u32 %v52, 4294901760
    %v564 = vsub.f32 %v52, %v563
    %v565 = vand.u32 %v564, 4294901760
    %566 = vmatpush1.msra.mxu0 %v565
    %567 = vmatprep.subr.mxu0 0.0
    %v568 = vand.u32 %v53, 4294901760
    %v569 = vsub.f32 %v53, %v568
    %v570 = vand.u32 %v569, 4294901760
    %571 = vmatpush1.msra.mxu0 %v570
    %572 = vmatprep.subr.mxu0 0.0
    %v573 = vand.u32 %v54, 4294901760
    %v574 = vsub.f32 %v54, %v573
    %v575 = vand.u32 %v574, 4294901760
    %576 = vmatpush1.msra.mxu0 %v575
    %577 = vmatprep.subr.mxu0 0.0
    %v578 = vand.u32 %v55, 4294901760
    %v579 = vsub.f32 %v55, %v578
    %v580 = vand.u32 %v579, 4294901760
    %581 = vmatpush1.msra.mxu0 %v580
    %582 = vmatprep.subr.mxu0 0.0
    %v583 = vand.u32 %v56, 4294901760
    %v584 = vsub.f32 %v56, %v583
    %v585 = vand.u32 %v584, 4294901760
    %586 = vmatpush1.msra.mxu0 %v585
    %587 = vmatprep.subr.mxu0 0.0
    %v588 = vand.u32 %v57, 4294901760
    %v589 = vsub.f32 %v57, %v588
    %v590 = vand.u32 %v589, 4294901760
    %591 = vmatpush1.msra.mxu0 %v590
    %592 = vmatprep.subr.mxu0 0.0
    %v593 = vand.u32 %v58, 4294901760
    %v594 = vsub.f32 %v58, %v593
    %v595 = vand.u32 %v594, 4294901760
    %596 = vmatpush1.msra.mxu0 %v595
    %597 = vmatprep.subr.mxu0 0.0
    %v598 = vand.u32 %v59, 4294901760
    %v599 = vsub.f32 %v59, %v598
    %v600 = vand.u32 %v599, 4294901760
    %601 = vmatpush1.msra.mxu0 %v600
    %602 = vmatprep.subr.mxu0 0.0
    %v603 = vand.u32 %v60, 4294901760
    %v604 = vsub.f32 %v60, %v603
    %v605 = vand.u32 %v604, 4294901760
    %606 = vmatpush1.msra.mxu0 %v605
    %607 = vmatprep.subr.mxu0 0.0
    %608 = vmatpush1.msra.mxu0 0.0
    %609 = vmatprep.subr.mxu0 0.0
    %610 = vmatpush1.msra.mxu0 0.0
    %611 = vmatprep.subr.mxu0 0.0
    %612 = vmatpush1.msra.mxu0 0.0
    %613 = vmatprep.subr.mxu0 0.0
    %614 = vmatpush1.msra.mxu0 0.0
    %615 = vmatprep.subr.mxu0 0.0
    %616 = vmatpush1.msra.mxu0 0.0
    %617 = vmatprep.subr.mxu0 0.0
    %618 = vmatpush1.msra.mxu0 0.0
    %619 = vmatprep.subr.mxu0 0.0
    %620 = vmatpush1.msra.mxu0 0.0
    %621 = vmatprep.subr.mxu0 0.0
    %622 = vmatpush1.msra.mxu0 0.0
    %623 = vmatprep.subr.mxu0 0.0
    %624 = vmatpush1.msra.mxu0 0.0
    %625 = vmatprep.subr.mxu0 0.0
    %626 = vmatpush1.msra.mxu0 0.0
    %627 = vmatprep.subr.mxu0 0.0
    %628 = vmatpush1.msra.mxu0 0.0
    %629 = vmatprep.subr.mxu0 0.0
    %630 = vmatpush1.msra.mxu0 0.0
    %631 = vmatprep.subr.mxu0 0.0
    %632 = vmatpush1.msra.mxu0 0.0
    %633 = vmatprep.subr.mxu0 0.0
    %634 = vmatpush1.msra.mxu0 0.0
    %635 = vmatprep.subr.mxu0 0.0
    %636 = vmatpush1.msra.mxu0 0.0
    %637 = vmatprep.subr.mxu0 0.0
    %638 = vmatpush1.msra.mxu0 0.0
    %639 = vmatprep.mubr.f32.mxu0 0.0
    %v640 = vand.u32 %v43, 4294901760
    %641 = vmatmul.mubr.f32.gmra.mrb[0].mxu0 %v640
    %v642 = vpop.f32.mrb[0].mxu0
    %v643 = vadd.f32 %v516, %v642
    %v644 = vpop.f32.mrb[0].mxu0
    %645 = vmatprep.mubr.f32.mxu0 0.0
    %v646 = vand.u32 %v44, 4294901760
    %647 = vmatmul.mubr.f32.gmra.mrb[0].mxu0 %v646
    %v648 = vpop.f32.mrb[0].mxu0
    %v649 = vadd.f32 %v524, %v648
    %v650 = vpop.f32.mrb[0].mxu0
    %651 = vdwg.mxu0
    %652 = vmatprep.subr.mxu0 0.0
    %v653 = vand.u32 %v45, 4294901760
    %654 = vmatpush1.msra.mxu0 %v653
    %655 = vmatprep.subr.mxu0 0.0
    %v656 = vand.u32 %v46, 4294901760
    %657 = vmatpush1.msra.mxu0 %v656
    %658 = vmatprep.subr.mxu0 0.0
    %v659 = vand.u32 %v47, 4294901760
    %660 = vmatpush1.msra.mxu0 %v659
    %661 = vmatprep.subr.mxu0 0.0
    %v662 = vand.u32 %v48, 4294901760
    %663 = vmatpush1.msra.mxu0 %v662
    %664 = vmatprep.subr.mxu0 0.0
    %v665 = vand.u32 %v49, 4294901760
    %666 = vmatpush1.msra.mxu0 %v665
    %667 = vmatprep.subr.mxu0 0.0
    %v668 = vand.u32 %v50, 4294901760
    %669 = vmatpush1.msra.mxu0 %v668
    %670 = vmatprep.subr.mxu0 0.0
    %v671 = vand.u32 %v51, 4294901760
    %672 = vmatpush1.msra.mxu0 %v671
    %673 = vmatprep.subr.mxu0 0.0
    %v674 = vand.u32 %v52, 4294901760
    %675 = vmatpush1.msra.mxu0 %v674
    %676 = vmatprep.subr.mxu0 0.0
    %v677 = vand.u32 %v53, 4294901760
    %678 = vmatpush1.msra.mxu0 %v677
    %679 = vmatprep.subr.mxu0 0.0
    %v680 = vand.u32 %v54, 4294901760
    %681 = vmatpush1.msra.mxu0 %v680
    %682 = vmatprep.subr.mxu0 0.0
    %v683 = vand.u32 %v55, 4294901760
    %684 = vmatpush1.msra.mxu0 %v683
    %685 = vmatprep.subr.mxu0 0.0
    %v686 = vand.u32 %v56, 4294901760
    %687 = vmatpush1.msra.mxu0 %v686
    %688 = vmatprep.subr.mxu0 0.0
    %v689 = vand.u32 %v57, 4294901760
    %690 = vmatpush1.msra.mxu0 %v689
    %691 = vmatprep.subr.mxu0 0.0
    %v692 = vand.u32 %v58, 4294901760
    %693 = vmatpush1.msra.mxu0 %v692
    %694 = vmatprep.subr.mxu0 0.0
    %v695 = vand.u32 %v59, 4294901760
    %696 = vmatpush1.msra.mxu0 %v695
    %697 = vmatprep.subr.mxu0 0.0
    %v698 = vand.u32 %v60, 4294901760
    %699 = vmatpush1.msra.mxu0 %v698
    %700 = vmatprep.subr.mxu0 0.0
    %701 = vmatpush1.msra.mxu0 0.0
    %702 = vmatprep.subr.mxu0 0.0
    %703 = vmatpush1.msra.mxu0 0.0
    %704 = vmatprep.subr.mxu0 0.0
    %705 = vmatpush1.msra.mxu0 0.0
    %706 = vmatprep.subr.mxu0 0.0
    %707 = vmatpush1.msra.mxu0 0.0
    %708 = vmatprep.subr.mxu0 0.0
    %709 = vmatpush1.msra.mxu0 0.0
    %710 = vmatprep.subr.mxu0 0.0
    %711 = vmatpush1.msra.mxu0 0.0
    %712 = vmatprep.subr.mxu0 0.0
    %713 = vmatpush1.msra.mxu0 0.0
    %714 = vmatprep.subr.mxu0 0.0
    %715 = vmatpush1.msra.mxu0 0.0
    %716 = vmatprep.subr.mxu0 0.0
    %717 = vmatpush1.msra.mxu0 0.0
    %718 = vmatprep.subr.mxu0 0.0
    %719 = vmatpush1.msra.mxu0 0.0
    %720 = vmatprep.subr.mxu0 0.0
    %721 = vmatpush1.msra.mxu0 0.0
    %722 = vmatprep.subr.mxu0 0.0
    %723 = vmatpush1.msra.mxu0 0.0
    %724 = vmatprep.subr.mxu0 0.0
    %725 = vmatpush1.msra.mxu0 0.0
    %726 = vmatprep.subr.mxu0 0.0
    %727 = vmatpush1.msra.mxu0 0.0
    %728 = vmatprep.subr.mxu0 0.0
    %729 = vmatpush1.msra.mxu0 0.0
    %730 = vmatprep.subr.mxu0 0.0
    %731 = vmatpush1.msra.mxu0 0.0
    %732 = vmatprep.mubr.f32.mxu0 0.0
    %v733 = vand.u32 %v43, 4294901760
    %734 = vmatmul.mubr.f32.gmra.mrb[0].mxu0 %v733
    %v735 = vpop.f32.mrb[0].mxu0
    %v736 = vadd.f32 %v643, %v735
    %v737 = vpop.f32.mrb[0].mxu0
    %738 = vmatprep.mubr.f32.mxu0 0.0
    %v739 = vand.u32 %v44, 4294901760
    %740 = vmatmul.mubr.f32.gmra.mrb[0].mxu0 %v739
    %v741 = vpop.f32.mrb[0].mxu0
    %v742 = vadd.f32 %v649, %v741
    %v743 = vpop.f32.mrb[0].mxu0
    %744 = vdwg.mxu0
    %v745 = vsub.f32 %v43, %v736
    %v746 = vsub.f32 %v44, %v742
    %v747 = vmul.f32 %v745, %v745
    %v748 = vmul.f32 %v746, %v746
    %749 = vmatprep.subr.mxu0 0.0
    %v750 = vand.u32 %v45, 4294901760
    %751 = vmatpush1.msra.mxu0 %v750
    %752 = vmatprep.subr.mxu0 0.0
    %v753 = vand.u32 %v46, 4294901760
    %754 = vmatpush1.msra.mxu0 %v753
    %755 = vmatprep.subr.mxu0 0.0
    %v756 = vand.u32 %v47, 4294901760
    %757 = vmatpush1.msra.mxu0 %v756
    %758 = vmatprep.subr.mxu0 0.0
    %v759 = vand.u32 %v48, 4294901760
    %760 = vmatpush1.msra.mxu0 %v759
    %761 = vmatprep.subr.mxu0 0.0
    %v762 = vand.u32 %v49, 4294901760
    %763 = vmatpush1.msra.mxu0 %v762
    %764 = vmatprep.subr.mxu0 0.0
    %v765 = vand.u32 %v50, 4294901760
    %766 = vmatpush1.msra.mxu0 %v765
    %767 = vmatprep.subr.mxu0 0.0
    %v768 = vand.u32 %v51, 4294901760
    %769 = vmatpush1.msra.mxu0 %v768
    %770 = vmatprep.subr.mxu0 0.0
    %v771 = vand.u32 %v52, 4294901760
    %772 = vmatpush1.msra.mxu0 %v771
    %773 = vmatprep.subr.mxu0 0.0
    %v774 = vand.u32 %v53, 4294901760
    %775 = vmatpush1.msra.mxu0 %v774
    %776 = vmatprep.subr.mxu0 0.0
    %v777 = vand.u32 %v54, 4294901760
    %778 = vmatpush1.msra.mxu0 %v777
    %779 = vmatprep.subr.mxu0 0.0
    %v780 = vand.u32 %v55, 4294901760
    %781 = vmatpush1.msra.mxu0 %v780
    %782 = vmatprep.subr.mxu0 0.0
    %v783 = vand.u32 %v56, 4294901760
    %784 = vmatpush1.msra.mxu0 %v783
    %785 = vmatprep.subr.mxu0 0.0
    %v786 = vand.u32 %v57, 4294901760
    %787 = vmatpush1.msra.mxu0 %v786
    %788 = vmatprep.subr.mxu0 0.0
    %v789 = vand.u32 %v58, 4294901760
    %790 = vmatpush1.msra.mxu0 %v789
    %791 = vmatprep.subr.mxu0 0.0
    %v792 = vand.u32 %v59, 4294901760
    %793 = vmatpush1.msra.mxu0 %v792
    %794 = vmatprep.subr.mxu0 0.0
    %v795 = vand.u32 %v60, 4294901760
    %796 = vmatpush1.msra.mxu0 %v795
    %797 = vmatprep.subr.mxu0 0.0
    %798 = vmatpush1.msra.mxu0 0.0
    %799 = vmatprep.subr.mxu0 0.0
    %800 = vmatpush1.msra.mxu0 0.0
    %801 = vmatprep.subr.mxu0 0.0
    %802 = vmatpush1.msra.mxu0 0.0
    %803 = vmatprep.subr.mxu0 0.0
    %804 = vmatpush1.msra.mxu0 0.0
    %805 = vmatprep.subr.mxu0 0.0
    %806 = vmatpush1.msra.mxu0 0.0
    %807 = vmatprep.subr.mxu0 0.0
    %808 = vmatpush1.msra.mxu0 0.0
    %809 = vmatprep.subr.mxu0 0.0
    %810 = vmatpush1.msra.mxu0 0.0
    %811 = vmatprep.subr.mxu0 0.0
    %812 = vmatpush1.msra.mxu0 0.0
    %813 = vmatprep.subr.mxu0 0.0
    %814 = vmatpush1.msra.mxu0 0.0
    %815 = vmatprep.subr.mxu0 0.0
    %816 = vmatpush1.msra.mxu0 0.0
    %817 = vmatprep.subr.mxu0 0.0
    %818 = vmatpush1.msra.mxu0 0.0
    %819 = vmatprep.subr.mxu0 0.0
    %820 = vmatpush1.msra.mxu0 0.0
    %821 = vmatprep.subr.mxu0 0.0
    %822 = vmatpush1.msra.mxu0 0.0
    %823 = vmatprep.subr.mxu0 0.0
    %824 = vmatpush1.msra.mxu0 0.0
    %825 = vmatprep.subr.mxu0 0.0
    %826 = vmatpush1.msra.mxu0 0.0
    %827 = vmatprep.subr.mxu0 0.0
    %828 = vmatpush1.msra.mxu0 0.0
    %829 = vmatprep.mubr.f32.mxu0 0.0
    %v830 = vand.u32 %v747, 4294901760
    %v831 = vsub.f32 %v747, %v830
    %v832 = vand.u32 %v831, 4294901760
    %v833 = vsub.f32 %v831, %v832
    %v834 = vand.u32 %v833, 4294901760
    %835 = vmatmul.mubr.f32.gmra.mrb[0].mxu0 %v834
    %v836 = vpop.f32.mrb[0].mxu0
    %v837 = vadd.f32 1e-05, %v836
    %v838 = vpop.f32.mrb[0].mxu0
    %839 = vmatprep.mubr.f32.mxu0 0.0
    %v840 = vand.u32 %v748, 4294901760
    %v841 = vsub.f32 %v748, %v840
    %v842 = vand.u32 %v841, 4294901760
    %v843 = vsub.f32 %v841, %v842
    %v844 = vand.u32 %v843, 4294901760
    %845 = vmatmul.mubr.f32.gmra.mrb[0].mxu0 %v844
    %v846 = vpop.f32.mrb[0].mxu0
    %v847 = vadd.f32 1e-05, %v846
    %v848 = vpop.f32.mrb[0].mxu0
    %849 = vdwg.mxu0
    %850 = vmatprep.subr.mxu0 0.0
    %v851 = vand.u32 %v45, 4294901760
    %v852 = vsub.f32 %v45, %v851
    %v853 = vand.u32 %v852, 4294901760
    %v854 = vsub.f32 %v852, %v853
    %v855 = vand.u32 %v854, 4294901760
    %856 = vmatpush1.msra.mxu0 %v855
    %857 = vmatprep.subr.mxu0 0.0
    %v858 = vand.u32 %v46, 4294901760
    %v859 = vsub.f32 %v46, %v858
    %v860 = vand.u32 %v859, 4294901760
    %v861 = vsub.f32 %v859, %v860
    %v862 = vand.u32 %v861, 4294901760
    %863 = vmatpush1.msra.mxu0 %v862
    %864 = vmatprep.subr.mxu0 0.0
    %v865 = vand.u32 %v47, 4294901760
    %v866 = vsub.f32 %v47, %v865
    %v867 = vand.u32 %v866, 4294901760
    %v868 = vsub.f32 %v866, %v867
    %v869 = vand.u32 %v868, 4294901760
    %870 = vmatpush1.msra.mxu0 %v869
    %871 = vmatprep.subr.mxu0 0.0
    %v872 = vand.u32 %v48, 4294901760
    %v873 = vsub.f32 %v48, %v872
    %v874 = vand.u32 %v873, 4294901760
    %v875 = vsub.f32 %v873, %v874
    %v876 = vand.u32 %v875, 4294901760
    %877 = vmatpush1.msra.mxu0 %v876
    %878 = vmatprep.subr.mxu0 0.0
    %v879 = vand.u32 %v49, 4294901760
    %v880 = vsub.f32 %v49, %v879
    %v881 = vand.u32 %v880, 4294901760
    %v882 = vsub.f32 %v880, %v881
    %v883 = vand.u32 %v882, 4294901760
    %884 = vmatpush1.msra.mxu0 %v883
    %885 = vmatprep.subr.mxu0 0.0
    %v886 = vand.u32 %v50, 4294901760
    %v887 = vsub.f32 %v50, %v886
    %v888 = vand.u32 %v887, 4294901760
    %v889 = vsub.f32 %v887, %v888
    %v890 = vand.u32 %v889, 4294901760
    %891 = vmatpush1.msra.mxu0 %v890
    %892 = vmatprep.subr.mxu0 0.0
    %v893 = vand.u32 %v51, 4294901760
    %v894 = vsub.f32 %v51, %v893
    %v895 = vand.u32 %v894, 4294901760
    %v896 = vsub.f32 %v894, %v895
    %v897 = vand.u32 %v896, 4294901760
    %898 = vmatpush1.msra.mxu0 %v897
    %899 = vmatprep.subr.mxu0 0.0
    %v900 = vand.u32 %v52, 4294901760
    %v901 = vsub.f32 %v52, %v900
    %v902 = vand.u32 %v901, 4294901760
    %v903 = vsub.f32 %v901, %v902
    %v904 = vand.u32 %v903, 4294901760
    %905 = vmatpush1.msra.mxu0 %v904
    %906 = vmatprep.subr.mxu0 0.0
    %v907 = vand.u32 %v53, 4294901760
    %v908 = vsub.f32 %v53, %v907
    %v909 = vand.u32 %v908, 4294901760
    %v910 = vsub.f32 %v908, %v909
    %v911 = vand.u32 %v910, 4294901760
    %912 = vmatpush1.msra.mxu0 %v911
    %913 = vmatprep.subr.mxu0 0.0
    %v914 = vand.u32 %v54, 4294901760
    %v915 = vsub.f32 %v54, %v914
    %v916 = vand.u32 %v915, 4294901760
    %v917 = vsub.f32 %v915, %v916
    %v918 = vand.u32 %v917, 4294901760
    %919 = vmatpush1.msra.mxu0 %v918
    %920 = vmatprep.subr.mxu0 0.0
    %v921 = vand.u32 %v55, 4294901760
    %v922 = vsub.f32 %v55, %v921
    %v923 = vand.u32 %v922, 4294901760
    %v924 = vsub.f32 %v922, %v923
    %v925 = vand.u32 %v924, 4294901760
    %926 = vmatpush1.msra.mxu0 %v925
    %927 = vmatprep.subr.mxu0 0.0
    %v928 = vand.u32 %v56, 4294901760
    %v929 = vsub.f32 %v56, %v928
    %v930 = vand.u32 %v929, 4294901760
    %v931 = vsub.f32 %v929, %v930
    %v932 = vand.u32 %v931, 4294901760
    %933 = vmatpush1.msra.mxu0 %v932
    %934 = vmatprep.subr.mxu0 0.0
    %v935 = vand.u32 %v57, 4294901760
    %v936 = vsub.f32 %v57, %v935
    %v937 = vand.u32 %v936, 4294901760
    %v938 = vsub.f32 %v936, %v937
    %v939 = vand.u32 %v938, 4294901760
    %940 = vmatpush1.msra.mxu0 %v939
    %941 = vmatprep.subr.mxu0 0.0
    %v942 = vand.u32 %v58, 4294901760
    %v943 = vsub.f32 %v58, %v942
    %v944 = vand.u32 %v943, 4294901760
    %v945 = vsub.f32 %v943, %v944
    %v946 = vand.u32 %v945, 4294901760
    %947 = vmatpush1.msra.mxu0 %v946
    %948 = vmatprep.subr.mxu0 0.0
    %v949 = vand.u32 %v59, 4294901760
    %v950 = vsub.f32 %v59, %v949
    %v951 = vand.u32 %v950, 4294901760
    %v952 = vsub.f32 %v950, %v951
    %v953 = vand.u32 %v952, 4294901760
    %954 = vmatpush1.msra.mxu0 %v953
    %955 = vmatprep.subr.mxu0 0.0
    %v956 = vand.u32 %v60, 4294901760
    %v957 = vsub.f32 %v60, %v956
    %v958 = vand.u32 %v957, 4294901760
    %v959 = vsub.f32 %v957, %v958
    %v960 = vand.u32 %v959, 4294901760
    %961 = vmatpush1.msra.mxu0 %v960
    %962 = vmatprep.subr.mxu0 0.0
    %963 = vmatpush1.msra.mxu0 0.0
    %964 = vmatprep.subr.mxu0 0.0
    %965 = vmatpush1.msra.mxu0 0.0
    %966 = vmatprep.subr.mxu0 0.0
    %967 = vmatpush1.msra.mxu0 0.0
    %968 = vmatprep.subr.mxu0 0.0
    %969 = vmatpush1.msra.mxu0 0.0
    %970 = vmatprep.subr.mxu0 0.0
    %971 = vmatpush1.msra.mxu0 0.0
    %972 = vmatprep.subr.mxu0 0.0
    %973 = vmatpush1.msra.mxu0 0.0
    %974 = vmatprep.subr.mxu0 0.0
    %975 = vmatpush1.msra.mxu0 0.0
    %976 = vmatprep.subr.mxu0 0.0
    %977 = vmatpush1.msra.mxu0 0.0
    %978 = vmatprep.subr.mxu0 0.0
    %979 = vmatpush1.msra.mxu0 0.0
    %980 = vmatprep.subr.mxu0 0.0
    %981 = vmatpush1.msra.mxu0 0.0
    %982 = vmatprep.subr.mxu0 0.0
    %983 = vmatpush1.msra.mxu0 0.0
    %984 = vmatprep.subr.mxu0 0.0
    %985 = vmatpush1.msra.mxu0 0.0
    %986 = vmatprep.subr.mxu0 0.0
    %987 = vmatpush1.msra.mxu0 0.0
    %988 = vmatprep.subr.mxu0 0.0
    %989 = vmatpush1.msra.mxu0 0.0
    %990 = vmatprep.subr.mxu0 0.0
    %991 = vmatpush1.msra.mxu0 0.0
    %992 = vmatprep.subr.mxu0 0.0
    %993 = vmatpush1.msra.mxu0 0.0
    %994 = vmatprep.mubr.f32.mxu0 0.0
    %v995 = vand.u32 %v747, 4294901760
    %996 = vmatmul.mubr.f32.gmra.mrb[0].mxu0 %v995
    %v997 = vpop.f32.mrb[0].mxu0
    %v998 = vadd.f32 %v837, %v997
    %v999 = vpop.f32.mrb[0].mxu0
    %1000 = vmatprep.mubr.f32.mxu0 0.0
    %v1001 = vand.u32 %v748, 4294901760
    %1002 = vmatmul.mubr.f32.gmra.mrb[0].mxu0 %v1001
    %v1003 = vpop.f32.mrb[0].mxu0
    %v1004 = vadd.f32 %v847, %v1003
    %v1005 = vpop.f32.mrb[0].mxu0
    %1006 = vdwg.mxu0
    %1007 = vmatprep.subr.mxu0 0.0
    %v1008 = vand.u32 %v45, 4294901760
    %v1009 = vsub.f32 %v45, %v1008
    %1010 = vmatpush1.msra.mxu0 %v1009
    %1011 = vmatprep.subr.mxu0 0.0
    %v1012 = vand.u32 %v46, 4294901760
    %v1013 = vsub.f32 %v46, %v1012
    %1014 = vmatpush1.msra.mxu0 %v1013
    %1015 = vmatprep.subr.mxu0 0.0
    %v1016 = vand.u32 %v47, 4294901760
    %v1017 = vsub.f32 %v47, %v1016
    %1018 = vmatpush1.msra.mxu0 %v1017
    %1019 = vmatprep.subr.mxu0 0.0
    %v1020 = vand.u32 %v48, 4294901760
    %v1021 = vsub.f32 %v48, %v1020
    %1022 = vmatpush1.msra.mxu0 %v1021
    %1023 = vmatprep.subr.mxu0 0.0
    %v1024 = vand.u32 %v49, 4294901760
    %v1025 = vsub.f32 %v49, %v1024
    %1026 = vmatpush1.msra.mxu0 %v1025
    %1027 = vmatprep.subr.mxu0 0.0
    %v1028 = vand.u32 %v50, 4294901760
    %v1029 = vsub.f32 %v50, %v1028
    %1030 = vmatpush1.msra.mxu0 %v1029
    %1031 = vmatprep.subr.mxu0 0.0
    %v1032 = vand.u32 %v51, 4294901760
    %v1033 = vsub.f32 %v51, %v1032
    %1034 = vmatpush1.msra.mxu0 %v1033
    %1035 = vmatprep.subr.mxu0 0.0
    %v1036 = vand.u32 %v52, 4294901760
    %v1037 = vsub.f32 %v52, %v1036
    %1038 = vmatpush1.msra.mxu0 %v1037
    %1039 = vmatprep.subr.mxu0 0.0
    %v1040 = vand.u32 %v53, 4294901760
    %v1041 = vsub.f32 %v53, %v1040
    %1042 = vmatpush1.msra.mxu0 %v1041
    %1043 = vmatprep.subr.mxu0 0.0
    %v1044 = vand.u32 %v54, 4294901760
    %v1045 = vsub.f32 %v54, %v1044
    %1046 = vmatpush1.msra.mxu0 %v1045
    %1047 = vmatprep.subr.mxu0 0.0
    %v1048 = vand.u32 %v55, 4294901760
    %v1049 = vsub.f32 %v55, %v1048
    %1050 = vmatpush1.msra.mxu0 %v1049
    %1051 = vmatprep.subr.mxu0 0.0
    %v1052 = vand.u32 %v56, 4294901760
    %v1053 = vsub.f32 %v56, %v1052
    %1054 = vmatpush1.msra.mxu0 %v1053
    %1055 = vmatprep.subr.mxu0 0.0
    %v1056 = vand.u32 %v57, 4294901760
    %v1057 = vsub.f32 %v57, %v1056
    %1058 = vmatpush1.msra.mxu0 %v1057
    %1059 = vmatprep.subr.mxu0 0.0
    %v1060 = vand.u32 %v58, 4294901760
    %v1061 = vsub.f32 %v58, %v1060
    %1062 = vmatpush1.msra.mxu0 %v1061
    %1063 = vmatprep.subr.mxu0 0.0
    %v1064 = vand.u32 %v59, 4294901760
    %v1065 = vsub.f32 %v59, %v1064
    %1066 = vmatpush1.msra.mxu0 %v1065
    %1067 = vmatprep.subr.mxu0 0.0
    %v1068 = vand.u32 %v60, 4294901760
    %v1069 = vsub.f32 %v60, %v1068
    %1070 = vmatpush1.msra.mxu0 %v1069
    %1071 = vmatprep.subr.mxu0 0.0
    %1072 = vmatpush1.msra.mxu0 0.0
    %1073 = vmatprep.subr.mxu0 0.0
    %1074 = vmatpush1.msra.mxu0 0.0
    %1075 = vmatprep.subr.mxu0 0.0
    %1076 = vmatpush1.msra.mxu0 0.0
    %1077 = vmatprep.subr.mxu0 0.0
    %1078 = vmatpush1.msra.mxu0 0.0
    %1079 = vmatprep.subr.mxu0 0.0
    %1080 = vmatpush1.msra.mxu0 0.0
    %1081 = vmatprep.subr.mxu0 0.0
    %1082 = vmatpush1.msra.mxu0 0.0
    %1083 = vmatprep.subr.mxu0 0.0
    %1084 = vmatpush1.msra.mxu0 0.0
    %1085 = vmatprep.subr.mxu0 0.0
    %1086 = vmatpush1.msra.mxu0 0.0
    %1087 = vmatprep.subr.mxu0 0.0
    %1088 = vmatpush1.msra.mxu0 0.0
    %1089 = vmatprep.subr.mxu0 0.0
    %1090 = vmatpush1.msra.mxu0 0.0
    %1091 = vmatprep.subr.mxu0 0.0
    %1092 = vmatpush1.msra.mxu0 0.0
    %1093 = vmatprep.subr.mxu0 0.0
    %1094 = vmatpush1.msra.mxu0 0.0
    %1095 = vmatprep.subr.mxu0 0.0
    %1096 = vmatpush1.msra.mxu0 0.0
    %1097 = vmatprep.subr.mxu0 0.0
    %1098 = vmatpush1.msra.mxu0 0.0
    %1099 = vmatprep.subr.mxu0 0.0
    %1100 = vmatpush1.msra.mxu0 0.0
    %1101 = vmatprep.subr.mxu0 0.0
    %1102 = vmatpush1.msra.mxu0 0.0
    %1103 = vmatprep.mubr.f32.mxu0 0.0
    %v1104 = vand.u32 %v747, 4294901760
    %v1105 = vsub.f32 %v747, %v1104
    %1106 = vmatmul.mubr.f32.gmra.mrb[0].mxu0 %v1105
    %v1107 = vpop.f32.mrb[0].mxu0
    %v1108 = vadd.f32 %v998, %v1107
    %v1109 = vpop.f32.mrb[0].mxu0
    %1110 = vmatprep.mubr.f32.mxu0 0.0
    %v1111 = vand.u32 %v748, 4294901760
    %v1112 = vsub.f32 %v748, %v1111
    %1113 = vmatmul.mubr.f32.gmra.mrb[0].mxu0 %v1112
    %v1114 = vpop.f32.mrb[0].mxu0
    %v1115 = vadd.f32 %v1004, %v1114
    %v1116 = vpop.f32.mrb[0].mxu0
    %1117 = vdwg.mxu0
    %1118 = vmatprep.subr.mxu0 0.0
    %v1119 = vand.u32 %v45, 4294901760
    %1120 = vmatpush1.msra.mxu0 %v1119
    %1121 = vmatprep.subr.mxu0 0.0
    %v1122 = vand.u32 %v46, 4294901760
    %1123 = vmatpush1.msra.mxu0 %v1122
    %1124 = vmatprep.subr.mxu0 0.0
    %v1125 = vand.u32 %v47, 4294901760
    %1126 = vmatpush1.msra.mxu0 %v1125
    %1127 = vmatprep.subr.mxu0 0.0
    %v1128 = vand.u32 %v48, 4294901760
    %1129 = vmatpush1.msra.mxu0 %v1128
    %1130 = vmatprep.subr.mxu0 0.0
    %v1131 = vand.u32 %v49, 4294901760
    %1132 = vmatpush1.msra.mxu0 %v1131
    %1133 = vmatprep.subr.mxu0 0.0
    %v1134 = vand.u32 %v50, 4294901760
    %1135 = vmatpush1.msra.mxu0 %v1134
    %1136 = vmatprep.subr.mxu0 0.0
    %v1137 = vand.u32 %v51, 4294901760
    %1138 = vmatpush1.msra.mxu0 %v1137
    %1139 = vmatprep.subr.mxu0 0.0
    %v1140 = vand.u32 %v52, 4294901760
    %1141 = vmatpush1.msra.mxu0 %v1140
    %1142 = vmatprep.subr.mxu0 0.0
    %v1143 = vand.u32 %v53, 4294901760
    %1144 = vmatpush1.msra.mxu0 %v1143
    %1145 = vmatprep.subr.mxu0 0.0
    %v1146 = vand.u32 %v54, 4294901760
    %1147 = vmatpush1.msra.mxu0 %v1146
    %1148 = vmatprep.subr.mxu0 0.0
    %v1149 = vand.u32 %v55, 4294901760
    %1150 = vmatpush1.msra.mxu0 %v1149
    %1151 = vmatprep.subr.mxu0 0.0
    %v1152 = vand.u32 %v56, 4294901760
    %1153 = vmatpush1.msra.mxu0 %v1152
    %1154 = vmatprep.subr.mxu0 0.0
    %v1155 = vand.u32 %v57, 4294901760
    %1156 = vmatpush1.msra.mxu0 %v1155
    %1157 = vmatprep.subr.mxu0 0.0
    %v1158 = vand.u32 %v58, 4294901760
    %1159 = vmatpush1.msra.mxu0 %v1158
    %1160 = vmatprep.subr.mxu0 0.0
    %v1161 = vand.u32 %v59, 4294901760
    %1162 = vmatpush1.msra.mxu0 %v1161
    %1163 = vmatprep.subr.mxu0 0.0
    %v1164 = vand.u32 %v60, 4294901760
    %1165 = vmatpush1.msra.mxu0 %v1164
    %1166 = vmatprep.subr.mxu0 0.0
    %1167 = vmatpush1.msra.mxu0 0.0
    %1168 = vmatprep.subr.mxu0 0.0
    %1169 = vmatpush1.msra.mxu0 0.0
    %1170 = vmatprep.subr.mxu0 0.0
    %1171 = vmatpush1.msra.mxu0 0.0
    %1172 = vmatprep.subr.mxu0 0.0
    %1173 = vmatpush1.msra.mxu0 0.0
    %1174 = vmatprep.subr.mxu0 0.0
    %1175 = vmatpush1.msra.mxu0 0.0
    %1176 = vmatprep.subr.mxu0 0.0
    %1177 = vmatpush1.msra.mxu0 0.0
    %1178 = vmatprep.subr.mxu0 0.0
    %1179 = vmatpush1.msra.mxu0 0.0
    %1180 = vmatprep.subr.mxu0 0.0
    %1181 = vmatpush1.msra.mxu0 0.0
    %1182 = vmatprep.subr.mxu0 0.0
    %1183 = vmatpush1.msra.mxu0 0.0
    %1184 = vmatprep.subr.mxu0 0.0
    %1185 = vmatpush1.msra.mxu0 0.0
    %1186 = vmatprep.subr.mxu0 0.0
    %1187 = vmatpush1.msra.mxu0 0.0
    %1188 = vmatprep.subr.mxu0 0.0
    %1189 = vmatpush1.msra.mxu0 0.0
    %1190 = vmatprep.subr.mxu0 0.0
    %1191 = vmatpush1.msra.mxu0 0.0
    %1192 = vmatprep.subr.mxu0 0.0
    %1193 = vmatpush1.msra.mxu0 0.0
    %1194 = vmatprep.subr.mxu0 0.0
    %1195 = vmatpush1.msra.mxu0 0.0
    %1196 = vmatprep.subr.mxu0 0.0
    %1197 = vmatpush1.msra.mxu0 0.0
    %1198 = vmatprep.mubr.f32.mxu0 0.0
    %v1199 = vand.u32 %v747, 4294901760
    %v1200 = vsub.f32 %v747, %v1199
    %v1201 = vand.u32 %v1200, 4294901760
    %1202 = vmatmul.mubr.f32.gmra.mrb[0].mxu0 %v1201
    %v1203 = vpop.f32.mrb[0].mxu0
    %v1204 = vadd.f32 %v1108, %v1203
    %v1205 = vpop.f32.mrb[0].mxu0
    %1206 = vmatprep.mubr.f32.mxu0 0.0
    %v1207 = vand.u32 %v748, 4294901760
    %v1208 = vsub.f32 %v748, %v1207
    %v1209 = vand.u32 %v1208, 4294901760
    %1210 = vmatmul.mubr.f32.gmra.mrb[0].mxu0 %v1209
    %v1211 = vpop.f32.mrb[0].mxu0
    %v1212 = vadd.f32 %v1115, %v1211
    %v1213 = vpop.f32.mrb[0].mxu0
    %1214 = vdwg.mxu0
    %1215 = vmatprep.subr.mxu0 0.0
    %v1216 = vand.u32 %v45, 4294901760
    %v1217 = vsub.f32 %v45, %v1216
    %v1218 = vand.u32 %v1217, 4294901760
    %1219 = vmatpush1.msra.mxu0 %v1218
    %1220 = vmatprep.subr.mxu0 0.0
    %v1221 = vand.u32 %v46, 4294901760
    %v1222 = vsub.f32 %v46, %v1221
    %v1223 = vand.u32 %v1222, 4294901760
    %1224 = vmatpush1.msra.mxu0 %v1223
    %1225 = vmatprep.subr.mxu0 0.0
    %v1226 = vand.u32 %v47, 4294901760
    %v1227 = vsub.f32 %v47, %v1226
    %v1228 = vand.u32 %v1227, 4294901760
    %1229 = vmatpush1.msra.mxu0 %v1228
    %1230 = vmatprep.subr.mxu0 0.0
    %v1231 = vand.u32 %v48, 4294901760
    %v1232 = vsub.f32 %v48, %v1231
    %v1233 = vand.u32 %v1232, 4294901760
    %1234 = vmatpush1.msra.mxu0 %v1233
    %1235 = vmatprep.subr.mxu0 0.0
    %v1236 = vand.u32 %v49, 4294901760
    %v1237 = vsub.f32 %v49, %v1236
    %v1238 = vand.u32 %v1237, 4294901760
    %1239 = vmatpush1.msra.mxu0 %v1238
    %1240 = vmatprep.subr.mxu0 0.0
    %v1241 = vand.u32 %v50, 4294901760
    %v1242 = vsub.f32 %v50, %v1241
    %v1243 = vand.u32 %v1242, 4294901760
    %1244 = vmatpush1.msra.mxu0 %v1243
    %1245 = vmatprep.subr.mxu0 0.0
    %v1246 = vand.u32 %v51, 4294901760
    %v1247 = vsub.f32 %v51, %v1246
    %v1248 = vand.u32 %v1247, 4294901760
    %1249 = vmatpush1.msra.mxu0 %v1248
    %1250 = vmatprep.subr.mxu0 0.0
    %v1251 = vand.u32 %v52, 4294901760
    %v1252 = vsub.f32 %v52, %v1251
    %v1253 = vand.u32 %v1252, 4294901760
    %1254 = vmatpush1.msra.mxu0 %v1253
    %1255 = vmatprep.subr.mxu0 0.0
    %v1256 = vand.u32 %v53, 4294901760
    %v1257 = vsub.f32 %v53, %v1256
    %v1258 = vand.u32 %v1257, 4294901760
    %1259 = vmatpush1.msra.mxu0 %v1258
    %1260 = vmatprep.subr.mxu0 0.0
    %v1261 = vand.u32 %v54, 4294901760
    %v1262 = vsub.f32 %v54, %v1261
    %v1263 = vand.u32 %v1262, 4294901760
    %1264 = vmatpush1.msra.mxu0 %v1263
    %1265 = vmatprep.subr.mxu0 0.0
    %v1266 = vand.u32 %v55, 4294901760
    %v1267 = vsub.f32 %v55, %v1266
    %v1268 = vand.u32 %v1267, 4294901760
    %1269 = vmatpush1.msra.mxu0 %v1268
    %1270 = vmatprep.subr.mxu0 0.0
    %v1271 = vand.u32 %v56, 4294901760
    %v1272 = vsub.f32 %v56, %v1271
    %v1273 = vand.u32 %v1272, 4294901760
    %1274 = vmatpush1.msra.mxu0 %v1273
    %1275 = vmatprep.subr.mxu0 0.0
    %v1276 = vand.u32 %v57, 4294901760
    %v1277 = vsub.f32 %v57, %v1276
    %v1278 = vand.u32 %v1277, 4294901760
    %1279 = vmatpush1.msra.mxu0 %v1278
    %1280 = vmatprep.subr.mxu0 0.0
    %v1281 = vand.u32 %v58, 4294901760
    %v1282 = vsub.f32 %v58, %v1281
    %v1283 = vand.u32 %v1282, 4294901760
    %1284 = vmatpush1.msra.mxu0 %v1283
    %1285 = vmatprep.subr.mxu0 0.0
    %v1286 = vand.u32 %v59, 4294901760
    %v1287 = vsub.f32 %v59, %v1286
    %v1288 = vand.u32 %v1287, 4294901760
    %1289 = vmatpush1.msra.mxu0 %v1288
    %1290 = vmatprep.subr.mxu0 0.0
    %v1291 = vand.u32 %v60, 4294901760
    %v1292 = vsub.f32 %v60, %v1291
    %v1293 = vand.u32 %v1292, 4294901760
    %1294 = vmatpush1.msra.mxu0 %v1293
    %1295 = vmatprep.subr.mxu0 0.0
    %1296 = vmatpush1.msra.mxu0 0.0
    %1297 = vmatprep.subr.mxu0 0.0
    %1298 = vmatpush1.msra.mxu0 0.0
    %1299 = vmatprep.subr.mxu0 0.0
    %1300 = vmatpush1.msra.mxu0 0.0
    %1301 = vmatprep.subr.mxu0 0.0
    %1302 = vmatpush1.msra.mxu0 0.0
    %1303 = vmatprep.subr.mxu0 0.0
    %1304 = vmatpush1.msra.mxu0 0.0
    %1305 = vmatprep.subr.mxu0 0.0
    %1306 = vmatpush1.msra.mxu0 0.0
    %1307 = vmatprep.subr.mxu0 0.0
    %1308 = vmatpush1.msra.mxu0 0.0
    %1309 = vmatprep.subr.mxu0 0.0
    %1310 = vmatpush1.msra.mxu0 0.0
    %1311 = vmatprep.subr.mxu0 0.0
    %1312 = vmatpush1.msra.mxu0 0.0
    %1313 = vmatprep.subr.mxu0 0.0
    %1314 = vmatpush1.msra.mxu0 0.0
    %1315 = vmatprep.subr.mxu0 0.0
    %1316 = vmatpush1.msra.mxu0 0.0
    %1317 = vmatprep.subr.mxu0 0.0
    %1318 = vmatpush1.msra.mxu0 0.0
    %1319 = vmatprep.subr.mxu0 0.0
    %1320 = vmatpush1.msra.mxu0 0.0
    %1321 = vmatprep.subr.mxu0 0.0
    %1322 = vmatpush1.msra.mxu0 0.0
    %1323 = vmatprep.subr.mxu0 0.0
    %1324 = vmatpush1.msra.mxu0 0.0
    %1325 = vmatprep.subr.mxu0 0.0
    %1326 = vmatpush1.msra.mxu0 0.0
    %1327 = vmatprep.mubr.f32.mxu0 0.0
    %v1328 = vand.u32 %v747, 4294901760
    %1329 = vmatmul.mubr.f32.gmra.mrb[0].mxu0 %v1328
    %v1330 = vpop.f32.mrb[0].mxu0
    %v1331 = vadd.f32 %v1204, %v1330
    %v1332 = vpop.f32.mrb[0].mxu0
    %1333 = vmatprep.mubr.f32.mxu0 0.0
    %v1334 = vand.u32 %v748, 4294901760
    %1335 = vmatmul.mubr.f32.gmra.mrb[0].mxu0 %v1334
    %v1336 = vpop.f32.mrb[0].mxu0
    %v1337 = vadd.f32 %v1212, %v1336
    %v1338 = vpop.f32.mrb[0].mxu0
    %1339 = vdwg.mxu0
    %1340 = vmatprep.subr.mxu0 0.0
    %v1341 = vand.u32 %v45, 4294901760
    %1342 = vmatpush1.msra.mxu0 %v1341
    %1343 = vmatprep.subr.mxu0 0.0
    %v1344 = vand.u32 %v46, 4294901760
    %1345 = vmatpush1.msra.mxu0 %v1344
    %1346 = vmatprep.subr.mxu0 0.0
    %v1347 = vand.u32 %v47, 4294901760
    %1348 = vmatpush1.msra.mxu0 %v1347
    %1349 = vmatprep.subr.mxu0 0.0
    %v1350 = vand.u32 %v48, 4294901760
    %1351 = vmatpush1.msra.mxu0 %v1350
    %1352 = vmatprep.subr.mxu0 0.0
    %v1353 = vand.u32 %v49, 4294901760
    %1354 = vmatpush1.msra.mxu0 %v1353
    %1355 = vmatprep.subr.mxu0 0.0
    %v1356 = vand.u32 %v50, 4294901760
    %1357 = vmatpush1.msra.mxu0 %v1356
    %1358 = vmatprep.subr.mxu0 0.0
    %v1359 = vand.u32 %v51, 4294901760
    %1360 = vmatpush1.msra.mxu0 %v1359
    %1361 = vmatprep.subr.mxu0 0.0
    %v1362 = vand.u32 %v52, 4294901760
    %1363 = vmatpush1.msra.mxu0 %v1362
    %1364 = vmatprep.subr.mxu0 0.0
    %v1365 = vand.u32 %v53, 4294901760
    %1366 = vmatpush1.msra.mxu0 %v1365
    %1367 = vmatprep.subr.mxu0 0.0
    %v1368 = vand.u32 %v54, 4294901760
    %1369 = vmatpush1.msra.mxu0 %v1368
    %1370 = vmatprep.subr.mxu0 0.0
    %v1371 = vand.u32 %v55, 4294901760
    %1372 = vmatpush1.msra.mxu0 %v1371
    %1373 = vmatprep.subr.mxu0 0.0
    %v1374 = vand.u32 %v56, 4294901760
    %1375 = vmatpush1.msra.mxu0 %v1374
    %1376 = vmatprep.subr.mxu0 0.0
    %v1377 = vand.u32 %v57, 4294901760
    %1378 = vmatpush1.msra.mxu0 %v1377
    %1379 = vmatprep.subr.mxu0 0.0
    %v1380 = vand.u32 %v58, 4294901760
    %1381 = vmatpush1.msra.mxu0 %v1380
    %1382 = vmatprep.subr.mxu0 0.0
    %v1383 = vand.u32 %v59, 4294901760
    %1384 = vmatpush1.msra.mxu0 %v1383
    %1385 = vmatprep.subr.mxu0 0.0
    %v1386 = vand.u32 %v60, 4294901760
    %1387 = vmatpush1.msra.mxu0 %v1386
    %1388 = vmatprep.subr.mxu0 0.0
    %1389 = vmatpush1.msra.mxu0 0.0
    %1390 = vmatprep.subr.mxu0 0.0
    %1391 = vmatpush1.msra.mxu0 0.0
    %1392 = vmatprep.subr.mxu0 0.0
    %1393 = vmatpush1.msra.mxu0 0.0
    %1394 = vmatprep.subr.mxu0 0.0
    %1395 = vmatpush1.msra.mxu0 0.0
    %1396 = vmatprep.subr.mxu0 0.0
    %1397 = vmatpush1.msra.mxu0 0.0
    %1398 = vmatprep.subr.mxu0 0.0
    %1399 = vmatpush1.msra.mxu0 0.0
    %1400 = vmatprep.subr.mxu0 0.0
    %1401 = vmatpush1.msra.mxu0 0.0
    %1402 = vmatprep.subr.mxu0 0.0
    %1403 = vmatpush1.msra.mxu0 0.0
    %1404 = vmatprep.subr.mxu0 0.0
    %1405 = vmatpush1.msra.mxu0 0.0
    %1406 = vmatprep.subr.mxu0 0.0
    %1407 = vmatpush1.msra.mxu0 0.0
    %1408 = vmatprep.subr.mxu0 0.0
    %1409 = vmatpush1.msra.mxu0 0.0
    %1410 = vmatprep.subr.mxu0 0.0
    %1411 = vmatpush1.msra.mxu0 0.0
    %1412 = vmatprep.subr.mxu0 0.0
    %1413 = vmatpush1.msra.mxu0 0.0
    %1414 = vmatprep.subr.mxu0 0.0
    %1415 = vmatpush1.msra.mxu0 0.0
    %1416 = vmatprep.subr.mxu0 0.0
    %1417 = vmatpush1.msra.mxu0 0.0
    %1418 = vmatprep.subr.mxu0 0.0
    %1419 = vmatpush1.msra.mxu0 0.0
    %1420 = vmatprep.mubr.f32.mxu0 0.0
    %v1421 = vand.u32 %v747, 4294901760
    %1422 = vmatmul.mubr.f32.gmra.mrb[0].mxu0 %v1421
    %v1423 = vpop.f32.mrb[0].mxu0
    %v1424 = vadd.f32 %v1331, %v1423
    %v1425 = vpop.f32.mrb[0].mxu0
    %1426 = vmatprep.mubr.f32.mxu0 0.0
    %v1427 = vand.u32 %v748, 4294901760
    %1428 = vmatmul.mubr.f32.gmra.mrb[0].mxu0 %v1427
    %v1429 = vpop.f32.mrb[0].mxu0
    %v1430 = vadd.f32 %v1337, %v1429
    %v1431 = vpop.f32.mrb[0].mxu0
    %1432 = vdwg.mxu0
    %v1433 = vrsqrt.pop %v1424
    %v1434 = vrsqrt.pop %v1430
    %v1435 = vmul.f32 %v745, %v1433
    %v1436 = vmul.f32 %v746, %v1434
    %v1437 = vld [vmem:[%s2] sm:$0x1]
    %v1439 = vlaneseq
    %v1440 = vshrl.u32 %v1439, 7
    %v1441 = vsub.s32 0, %v1440
    %v1442 = vrot.slane %v1437, %v1441
    %v1444 = vmul.f32 %v1435, %v1442
    %v1445 = vmul.f32 %v1436, %v1442
    %1446 = vst [vmem:[#allocation7] sm:$0xff] %v1444
    %1447 = vst [vmem:[#allocation7 + $0x8] sm:$0xff] %v1445
    // Predicated region
    $region22: #{tpu_custom_call.1} parent=1 // pred_check
      _
    $region23: #{tpu_custom_call.1} parent=1 // pred_check_branch
      %1449 = sbr.rel (0) target = $region25
    $region24: #{tpu_custom_call.1} parent=1 // pred_region
      %s1451 = ssub.s32 256, 256
      %1452 = vsyncadd [#allocation4], %s1451
      %s1453 = sshll.u32 [#allocation7], 4
      %s1454 = int_to_ptr.vmem [resolvable:$true] %s1453
      %1459 = dma.vmem_to_hbm [thread:$0]  %s1454, 256, %s3, [#allocation4], 128, 128, 8
    $region25: #{tpu_custom_call.1} parent=1 // pred_fallthru
      _
    // Predicated region
    $region26: #{tpu_custom_call.1} parent=1 // pred_check
      _
    $region27: #{tpu_custom_call.1} parent=1 // pred_check_branch
      %1461 = sbr.rel (0) target = $region29
    $region28: #{tpu_custom_call.1} parent=1 // pred_region
      %1462 = dma.done [#allocation4], 256
    $region29: #{tpu_custom_call.1} parent=1 // pred_fallthru
      _
    %1463 = vsyncpa [#allocation3], 1
    %1464 = vsyncpa [#allocation6], 1
    %1465 = vsyncpa [#allocation4], 1

</llo_original>
